<compile_context>
chip_gen: v5e
topology: v5e:2x2
jax: 0.10.0
libtpu: 0.0.40
codegen_flags: <defaults>
</compile_context>

<pallas_src>
import functools
import math

import jax
import jax.numpy as jnp
from jax.experimental import pallas as pl
from jax.experimental.pallas import tpu as pltpu


# ~4 MiB per input tile; double-buffered inputs stay well under the 16 MiB
# scoped-VMEM default on v5e and leave plenty of headroom on v7x (64 MiB).
_TILE_BYTES = 4 * 1024 * 1024
_MAX_FULL_K_BYTES = 64 * 1024  # keep the reduce axis un-tiled if a row <= 64 KiB


def _lane_tiles(R, K, itemsize):
    """Pick (TR, TK) for the lane-reduce kernel."""
    TK = K
    if K * itemsize > _MAX_FULL_K_BYTES:
        # Only split K into evenly dividing multiples of 128 so no padded
        # (garbage) lanes ever enter the running sum.
        for t in range(8192, 127, -128):
            if K % t == 0:
                TK = t
                break
    rows = max(1, _TILE_BYTES // (TK * itemsize))
    if rows >= R:
        TR = R
    else:
        TR = min(R, max(8, (rows // 8) * 8))
    return TR, TK


def _mid_tiles(A, Rm, B, itemsize):
    """Pick (TA, TB) for the middle-axis-reduce kernel (Rm kept whole)."""
    TB = B if B <= 2048 else 2048  # full B, or a multiple-of-128 lane tile
    rows = max(1, _TILE_BYTES // (Rm * TB * itemsize))
    if rows >= A:
        TA = A
    else:
        TA = min(A, max(8, (rows // 8) * 8))
    return TA, TB


def _lane_mean_kernel(x_ref, o_ref, acc_ref, *, inv_k):
    """Mean over the last (lane) axis of a (TR, TK) block, streamed over K.

    grid = (row_tiles, k_tiles).  The K axis is a sequential reduction axis
    accumulated in an f32 VMEM scratch; init at k==0, scale+store at k==last.
    """
    k = pl.program_id(1)

    @pl.when(k == 0)
    def _init():
        acc_ref[...] = jnp.zeros_like(acc_ref)

    acc_ref[...] += jnp.sum(
        x_ref[...].astype(jnp.float32), axis=-1, keepdims=True
    )

    @pl.when(k == pl.num_programs(1) - 1)
    def _finalize():
        o_ref[...] = (acc_ref[...] * inv_k).astype(o_ref.dtype)


def lane_mean(x2d):
    """Pallas row-mean: [R, K] -> [R, 1] (mean over axis -1), tiled+pipelined."""
    R, K = x2d.shape
    itemsize = jnp.dtype(x2d.dtype).itemsize
    TR, TK = _lane_tiles(R, K, itemsize)
    num_r = -(-R // TR)        # ragged last row-block is masked on store
    num_k = K // TK            # TK == K or TK evenly divides K
    kernel = functools.partial(_lane_mean_kernel, inv_k=1.0 / K)
    return pl.pallas_call(
        kernel,
        out_shape=jax.ShapeDtypeStruct((R, 1), x2d.dtype),
        grid=(num_r, num_k),
        in_specs=[pl.BlockSpec((TR, TK), lambda i, k: (i, k))],
        out_specs=pl.BlockSpec((TR, 1), lambda i, k: (i, 0)),
        scratch_shapes=[pltpu.VMEM((TR, 1), jnp.float32)],
        compiler_params=pltpu.CompilerParams(
            dimension_semantics=("parallel", "arbitrary")
        ),
    )(x2d)


def _mid_mean_kernel(x_ref, o_ref, *, inv_r):
    """Mean over the middle axis of a (TA, Rm, TB) block.

    The reduced axis sits on sublanes; lanes (TB) stay dense, so no input
    transpose is needed and the store is an unmasked, lane-dense vst.
    """
    o_ref[...] = (
        jnp.sum(x_ref[...].astype(jnp.float32), axis=1) * inv_r
    ).astype(o_ref.dtype)


def mid_mean(x3):
    """Pallas mean over axis 1: [A, Rm, B] -> [A, B], tiled over A and B."""
    A, Rm, B = x3.shape
    itemsize = jnp.dtype(x3.dtype).itemsize
    TA, TB = _mid_tiles(A, Rm, B, itemsize)
    num_a = -(-A // TA)
    num_b = -(-B // TB)
    kernel = functools.partial(_mid_mean_kernel, inv_r=1.0 / Rm)
    return pl.pallas_call(
        kernel,
        out_shape=jax.ShapeDtypeStruct((A, B), x3.dtype),
        grid=(num_a, num_b),
        in_specs=[pl.BlockSpec((TA, Rm, TB), lambda a, b: (a, 0, b))],
        out_specs=pl.BlockSpec((TA, TB), lambda a, b: (a, b)),
        compiler_params=pltpu.CompilerParams(
            dimension_semantics=("parallel", "parallel")
        ),
    )(x3)


def _mean_single_dim(x, dim):
    """x.mean(dim=dim), keepdim=False, with no transpose (reshape-only views)."""
    d = dim % x.ndim
    out_shape = x.shape[:d] + x.shape[d + 1:]
    if d == x.ndim - 1:
        K = x.shape[-1]
        R = int(math.prod(out_shape)) if out_shape else 1
        return lane_mean(x.reshape(R, K)).reshape(out_shape)
    A = int(math.prod(x.shape[:d]))
    B = int(math.prod(x.shape[d + 1:]))
    return mid_mean(x.reshape(A, x.shape[d], B)).reshape(out_shape)


class MultiDimMean:
    """JAX/Pallas port of MultiDimMean's forward pass (float semantics).

    - len(dims) == 1: x.mean(dim=dims[0])                       (keepdim=False)
    - len(dims) == 2: global AvgPool2d over the last two dims
                      * 4-D [N,C,H,W] -> [N,C,1,1]
                      * 3-D [N,C,L]   -> [N,1,1]
    - len(dims) >  2: global AvgPool2d then mean over dim 1     -> [N,1,1]
                      (fused here into one streaming mean over C*H*W)
    """

    def __init__(self, dims):
        self.dims = tuple(int(d) for d in dims)

    def __call__(self, x):
        dims = self.dims
        if len(dims) == 1:
            return _mean_single_dim(x, dims[0])

        # avg_pooling: kernel_size == x.shape[-2:]  => global mean.
        if x.ndim < 4:
            N, C, L = x.shape
            pooled = lane_mean(x.reshape(N, C * L))          # (N, 1)
            if len(dims) > 2:
                # post_mean over dim 1 of the (N,1,1) pooled result (size-1 dim)
                return pooled.reshape(N, 1)
            return pooled.reshape(N, 1, 1)

        N, C, H, W = x.shape
        if len(dims) > 2:
            # Fused pool-over-(H,W) + mean-over-C == one mean over C*H*W:
            # single streaming pass, no tiny second kernel, no HBM round-trip.
            return lane_mean(x.reshape(N, C * H * W)).reshape(N, 1, 1)
        return lane_mean(x.reshape(N * C, H * W)).reshape(N, C, 1, 1)


if __name__ == "__main__":
    key = jax.random.PRNGKey(0)
    k1, k2 = jax.random.split(key)

    # NCHW input consistent with the module (batch=2, channels=4, spatial=16)
    x = jax.random.normal(k1, (2, 4, 16, 16), dtype=jnp.float32)
    # 3-D input [N, C, L] for the ndim<4 avg-pool branch
    x3 = jax.random.normal(k2, (2, 4, 16), dtype=jnp.float32)

    ok = True

    # Case len(dims) == 3: [N,C,H,W] -> [N,1,1]  (fused single pass)
    y3 = jax.block_until_ready(MultiDimMean((1, 2, 3))(x))
    ref3 = jnp.mean(x, axis=(1, 2, 3)).reshape(2, 1, 1)
    ok &= y3.shape == (2, 1, 1)
    ok &= bool(jnp.allclose(y3, ref3, rtol=1e-5, atol=1e-6))

    # Case len(dims) == 2: [N,C,H,W] -> [N,C,1,1]
    y2 = jax.block_until_ready(MultiDimMean((2, 3))(x))
    ref2 = jnp.mean(x, axis=(2, 3), keepdims=True)
    ok &= y2.shape == (2, 4, 1, 1)
    ok &= bool(jnp.allclose(y2, ref2, rtol=1e-5, atol=1e-6))

    # Case len(dims) == 2 with 3-D input: [N,C,L] -> [N,1,1]
    y2b = jax.block_until_ready(MultiDimMean((1, 2))(x3))
    ref2b = jnp.mean(x3, axis=(1, 2)).reshape(2, 1, 1)
    ok &= y2b.shape == (2, 1, 1)
    ok &= bool(jnp.allclose(y2b, ref2b, rtol=1e-5, atol=1e-6))

    # Case len(dims) == 1, middle dim (channel mean, no transpose): -> [N,H,W]
    y1 = jax.block_until_ready(MultiDimMean((1,))(x))
    ref1 = jnp.mean(x, axis=1)
    ok &= y1.shape == (2, 16, 16)
    ok &= bool(jnp.allclose(y1, ref1, rtol=1e-5, atol=1e-6))

    # Case len(dims) == 1, last dim (lane-reduce path): -> [N,C,H]
    y1b = jax.block_until_ready(MultiDimMean((3,))(x))
    ref1b = jnp.mean(x, axis=3)
    ok &= y1b.shape == (2, 4, 16)
    ok &= bool(jnp.allclose(y1b, ref1b, rtol=1e-5, atol=1e-6))

    if ok:
        print("KERNEL_OK")
    else:
        raise SystemExit("mismatch vs reference")
</pallas_src>

<mosaic_0001>
module attributes {stable_mosaic.version = 11 : i64} {
  func.func @_lane_mean_kernel(%arg0: i32, %arg1: i32, %arg2: memref<2x1024xf32, #tpu.memory_space<vmem>>, %arg3: memref<2x1xf32, #tpu.memory_space<vmem>>, %arg4: memref<2x1xf32, #tpu.memory_space<vmem>>) attributes {dimension_semantics = [#tpu.dimension_semantics<parallel>, #tpu.dimension_semantics<arbitrary>], iteration_bounds = array<i64: 1, 1>, scalar_prefetch = 0 : i64, scratch_operands = 1 : i64, tpu.core_type = #tpu.core_type<tc>, window_params = [{transform_indices = @transform_0, window_bounds = array<i64: 2, 1024>}, {transform_indices = @transform_1, window_bounds = array<i64: 2, 1>}]} {
    %c0_i32 = arith.constant 0 : i32
    %0 = arith.cmpi eq, %arg1, %c0_i32 : i32
    %1 = arith.extui %0 : i1 to i32
    %c0_i32_0 = arith.constant 0 : i32
    %2 = arith.cmpi ne, %1, %c0_i32_0 : i32
    scf.if %2 {
      %cst_8 = arith.constant 0.000000e+00 : f32
      %12 = vector.broadcast %cst_8 : f32 to vector<2x1xf32>
      %c0_9 = arith.constant 0 : index
      %c0_10 = arith.constant 0 : index
      %13 = vector.load %arg4[%c0_9, %c0_10] : memref<2x1xf32, #tpu.memory_space<vmem>>, vector<2x1xf32>
      tpu.vector_store %arg4[%c0_9, %c0_10], %12 {strides = array<i32>} : memref<2x1xf32, #tpu.memory_space<vmem>>, vector<2x1xf32>,
    } else {
    }
    %c0 = arith.constant 0 : index
    %c0_1 = arith.constant 0 : index
    %3 = vector.load %arg4[%c0, %c0_1] : memref<2x1xf32, #tpu.memory_space<vmem>>, vector<2x1xf32>
    %c0_2 = arith.constant 0 : index
    %c0_3 = arith.constant 0 : index
    %4 = vector.load %arg2[%c0_2, %c0_3] : memref<2x1024xf32, #tpu.memory_space<vmem>>, vector<2x1024xf32>
    %cst = arith.constant dense<0.000000e+00> : vector<2xf32>
    %5 = vector.multi_reduction <add>, %4, %cst [1] : vector<2x1024xf32> to vector<2xf32>
    %6 = vector.shape_cast %5 : vector<2xf32> to vector<2x1xf32>
    %7 = arith.addf %3, %6 : vector<2x1xf32>
    %c0_4 = arith.constant 0 : index
    %c0_5 = arith.constant 0 : index
    %8 = vector.load %arg4[%c0_4, %c0_5] : memref<2x1xf32, #tpu.memory_space<vmem>>, vector<2x1xf32>
    tpu.vector_store %arg4[%c0_4, %c0_5], %7 {strides = array<i32>} : memref<2x1xf32, #tpu.memory_space<vmem>>, vector<2x1xf32>,
    %c0_i32_6 = arith.constant 0 : i32
    %9 = arith.cmpi eq, %arg1, %c0_i32_6 : i32
    %10 = arith.extui %9 : i1 to i32
    %c0_i32_7 = arith.constant 0 : i32
    %11 = arith.cmpi ne, %10, %c0_i32_7 : i32
    scf.if %11 {
      %c0_8 = arith.constant 0 : index
      %c0_9 = arith.constant 0 : index
      %12 = vector.load %arg4[%c0_8, %c0_9] : memref<2x1xf32, #tpu.memory_space<vmem>>, vector<2x1xf32>
      %cst_10 = arith.constant 9.765625E-4 : f32
      %13 = vector.broadcast %cst_10 : f32 to vector<2x1xf32>
      %14 = arith.mulf %12, %13 : vector<2x1xf32>
      %c0_11 = arith.constant 0 : index
      %c0_12 = arith.constant 0 : index
      %15 = vector.load %arg3[%c0_11, %c0_12] : memref<2x1xf32, #tpu.memory_space<vmem>>, vector<2x1xf32>
      tpu.vector_store %arg3[%c0_11, %c0_12], %14 {strides = array<i32>} : memref<2x1xf32, #tpu.memory_space<vmem>>, vector<2x1xf32>,
    } else {
    }
    return
  }
  func.func @transform_0(%arg0: i32, %arg1: i32) -> (i32, i32) {
    %c0_i32 = arith.constant 0 : i32
    return %arg0, %arg1 : i32, i32
  }
  func.func @transform_1(%arg0: i32, %arg1: i32) -> (i32, i32) {
    %c0_i32 = arith.constant 0 : i32
    %c0_i32_0 = arith.constant 0 : i32
    return %arg0, %c0_i32 : i32, i32
  }
}

</mosaic_0001>

<llo_original>
// kernel: tpu_custom_call.1
$region0: #{tpu_custom_call.1}
  #allocation0 [shape = 'u32[]', space=smem, size = 0x4, offset = 0x4, fixed_abs, tag = 'smem constant byte address 0x4 - core index']
  #allocation1 [shape = 'u32[72,128]{1,0:T(1,128)}', space=vmem, size = 0x9000, scoped, tag = 'internal scratch']
  #allocation2 [shape = 'f32[2,1]{1,0:T(2,128)}', space=vmem, size = 0x400, scoped, tag = 'scratch operand']
  %s0 = inlined_call_operand.hbm [shape: f32[2,1024], index: 0, kind: input, shape index: {}]
  %s1 = inlined_call_operand.vmem [shape: f32[2,1], index: 1, kind: output, shape index: {}]
  %s2 = sld [smem:[#allocation0]]
  $region26: #{tpu_custom_call.1} parent=0
    _
  %s4 = ssub.s32 1, %s2
  %s5 = scalar_select 0, %s4, %s2
  $region1: #{tpu_custom_call.1} parent=0
    #allocation3 [shape = 'u8[8192]{0}', space=vmem, size = 0x2000, scoped, tag = 'input window, operand 0, single buffered']
    #allocation4 [shape = 's32[1]{0}', space=sflag, size = 0x4, scoped, tag = 'scoped memory for tpu_custom_call.1']
    %6 = vsyncpa [#allocation4], 0
    // Predicated region
    $region2: #{tpu_custom_call.1} parent=1 // pred_check
      _
    $region3: #{tpu_custom_call.1} parent=1 // pred_check_branch
      %8 = sbr.rel (0) target = $region5
    $region4: #{tpu_custom_call.1} parent=1 // pred_region
      %10 = vsyncadd [#allocation4], 0
      %s12 = sshll.u32 %s0, 4
      %s13 = int_to_ptr.hbm [resolvable:$true] %s12
      %s14 = sshll.u32 [#allocation3], 4
      %s15 = int_to_ptr.vmem [resolvable:$true] %s14
      %17 = dma.hbm_to_vmem [thread:$0]  %s13, 256, %s15, [#allocation4]
    $region5: #{tpu_custom_call.1} parent=1 // pred_fallthru
      _
    // Predicated region
    $region6: #{tpu_custom_call.1} parent=1 // pred_check
      _
    $region7: #{tpu_custom_call.1} parent=1 // pred_check_branch
      %19 = sbr.rel (0) target = $region9
    $region8: #{tpu_custom_call.1} parent=1 // pred_region
      %21 = dma.done [#allocation4], 256
    $region9: #{tpu_custom_call.1} parent=1 // pred_fallthru
      _
    %p22 = scmp.eq.s32.totalorder 0, 0
    // Predicated region
    $region10: #{tpu_custom_call.1} parent=1 // pred_check
      %p23 = pneg %p22
    $region11: #{tpu_custom_call.1} parent=1 // pred_check_branch
      %25 = sbr.rel (%p23) target = $region13
    $region12: #{tpu_custom_call.1} parent=1 // pred_region
      %vm26 = vcmask 1024
      %27 = vst.msk [vmem:[#allocation2] sm:$0x3] %vm26, 0.0
    $region13: #{tpu_custom_call.1} parent=1 // pred_fallthru
      _
    %v28 = vld [vmem:[#allocation2] sm:$0x3]
    %v29 = vld [vmem:[#allocation3] sm:$0xff]
    %v30 = vld [vmem:[#allocation3 + $0x8] sm:$0xff]
    %33 = vst [vmem:[#allocation1] ss:$4 sm:$0xff] %v29
    %s34 = scalar_lea.vmem [#allocation1], 32
    %35 = vst [vmem:[%s34] ss:$4 sm:$0xff] %v30
    %v36 = vld.sshfl [vmem:[#allocation1] sm:$0xff pattern:$0x73625140]
    %v37 = vld.sshfl [vmem:[#allocation1 + $0x8] sm:$0xff pattern:$0x73625140]
    %v38 = vld.sshfl [vmem:[#allocation1 + $0x10] sm:$0xff pattern:$0x73625140]
    %v39 = vld.sshfl [vmem:[#allocation1 + $0x18] sm:$0xff pattern:$0x73625140]
    %v40 = vld.sshfl [vmem:[#allocation1 + $0x20] sm:$0xff pattern:$0x73625140]
    %v41 = vld.sshfl [vmem:[#allocation1 + $0x28] sm:$0xff pattern:$0x73625140]
    %v42 = vld.sshfl [vmem:[#allocation1 + $0x30] sm:$0xff pattern:$0x73625140]
    %v43 = vld.sshfl [vmem:[#allocation1 + $0x38] sm:$0xff pattern:$0x73625140]
    %vm52 = vcmask 1041408
    %v53 = vsel %vm52, %v36, 0.0
    %v54 = vsel %vm52, %v37, 0.0
    %v55 = vadd.f32 %v53, %v54
    %v56 = vsel %vm52, %v38, 0.0
    %v57 = vadd.f32 %v55, %v56
    %v58 = vsel %vm52, %v39, 0.0
    %v59 = vadd.f32 %v57, %v58
    %v60 = vsel %vm52, %v40, 0.0
    %v61 = vadd.f32 %v59, %v60
    %v62 = vsel %vm52, %v41, 0.0
    %v63 = vadd.f32 %v61, %v62
    %v64 = vsel %vm52, %v42, 0.0
    %v65 = vadd.f32 %v63, %v64
    %v66 = vsel %vm52, %v43, 0.0
    %v67 = vadd.f32 %v65, %v66
    %68 = vadd.xlane.f32.xlu0 %v67
    %v69 = vpop.xlane.xlu0 %68
    %v70 = vadd.f32 %v28, %v69
    %vm71 = vcmask 1024
    %72 = vst.msk [vmem:[#allocation2] sm:$0x3] %vm71, %v70
    // Predicated region
    $region14: #{tpu_custom_call.1} parent=1 // pred_check
      %p73 = pneg %p22
    $region15: #{tpu_custom_call.1} parent=1 // pred_check_branch
      %75 = sbr.rel (%p73) target = $region17
    $region16: #{tpu_custom_call.1} parent=1 // pred_region
      %v76 = vld [vmem:[#allocation2] sm:$0x3]
      %v77 = vmul.f32 %v76, 0.0009765625
      %78 = vst.msk [vmem:[%s1] sm:$0x3] %vm71, %v77
    $region17: #{tpu_custom_call.1} parent=1 // pred_fallthru
      _
    // Predicated region
    $region18: #{tpu_custom_call.1} parent=1 // pred_check
      _
    $region19: #{tpu_custom_call.1} parent=1 // pred_check_branch
      %80 = sbr.rel (0) target = $region21
    $region20: #{tpu_custom_call.1} parent=1 // pred_region
      _
    $region21: #{tpu_custom_call.1} parent=1 // pred_fallthru
      _
    // Predicated region
    $region22: #{tpu_custom_call.1} parent=1 // pred_check
      _
    $region23: #{tpu_custom_call.1} parent=1 // pred_check_branch
      %82 = sbr.rel (0) target = $region25
    $region24: #{tpu_custom_call.1} parent=1 // pred_region
      _
    $region25: #{tpu_custom_call.1} parent=1 // pred_fallthru
      _
    %83 = vsyncpa [#allocation4], 1

</llo_original>
